<compile_context>
chip_gen: v6e
topology: v6e:2x2x1
jax: 0.10.0
libtpu: 0.0.40
codegen_flags: <defaults>
</compile_context>

<pallas_src>
import functools
import math

import jax
import jax.numpy as jnp
from jax.experimental import pallas as pl
from jax.experimental.pallas import tpu as pltpu


def _round_up(x, m):
    return ((x + m - 1) // m) * m


def _feature_transform_kernel(x_ref, w_ref, o_ref):
    # support_tile = x_tile @ W   (f32 accumulation on the MXU)
    o_ref[...] = jnp.dot(
        x_ref[...], w_ref[...], preferred_element_type=jnp.float32
    ).astype(o_ref.dtype)


def _aggregate_kernel(adj_ref, s_ref, b_ref, o_ref, acc_ref):
    # out_tile = sum_k adj[i, k] @ support[k]  (+ bias in the epilogue)
    k = pl.program_id(1)

    @pl.when(k == 0)
    def _init():
        acc_ref[...] = jnp.zeros_like(acc_ref)

    acc_ref[...] += jnp.dot(
        adj_ref[...], s_ref[...], preferred_element_type=jnp.float32
    )

    @pl.when(k == pl.num_programs(1) - 1)
    def _epilogue():
        o_ref[...] = (acc_ref[...] + b_ref[...]).astype(o_ref.dtype)


def graph_convolution(
    x,
    adj,
    weight,
    bias=None,
    *,
    tile_m=256,               # row tile of x for the feature transform
    tile_n=256,               # row tile of adj / output
    tile_k=1024,              # contraction tile (adj columns / support rows)
    matmul_dtype=None,        # e.g. jnp.bfloat16: halve HBM bytes on adj/support
    vmem_limit_bytes=32 * 1024 * 1024,
):
    """output = adj @ (x @ weight) + bias, as two Pallas TPU kernels."""
    N, f_in = x.shape
    f_out = weight.shape[1]
    assert adj.shape == (N, N)
    assert weight.shape == (f_in, f_out)
    out_dtype = x.dtype

    if bias is None:
        bias = jnp.zeros((f_out,), dtype=jnp.float32)
    bias2d = bias.reshape(1, f_out).astype(jnp.float32)

    # ---- tile / padding bookkeeping ------------------------------------
    # adj row tile: second-minor dim -> multiple of 8.
    tile_n = min(tile_n, _round_up(N, 8))
    tile_n = max(8, tile_n - tile_n % 8)
    # adj contraction tile: minor (lane) dim -> multiple of 128.
    tile_k = min(tile_k, _round_up(N, 128))
    tile_k = max(128, tile_k - tile_k % 128)

    rows_pad = _round_up(N, tile_n)    # padded adj rows / output rows
    cols_pad = _round_up(N, tile_k)    # padded adj cols / support rows

    # x row tile: must divide cols_pad (a multiple of 128) and be a multiple of 8.
    tile_m = min(tile_m, cols_pad)
    tile_m = max(8, tile_m - tile_m % 8)
    while cols_pad % tile_m:
        tile_m -= 8

    # ---- zero-pad inputs so partial tiles never contribute garbage -----
    x_p = x if cols_pad == N else jnp.pad(x, ((0, cols_pad - N), (0, 0)))
    adj_p = adj
    if rows_pad != N or cols_pad != N:
        adj_p = jnp.pad(adj, ((0, rows_pad - N), (0, cols_pad - N)))

    support_dtype = matmul_dtype if matmul_dtype is not None else out_dtype
    if matmul_dtype is not None:
        adj_p = adj_p.astype(matmul_dtype)

    # ---- kernel 1: support = x @ W (computed once, hoisted) ------------
    support = pl.pallas_call(
        _feature_transform_kernel,
        out_shape=jax.ShapeDtypeStruct((cols_pad, f_out), support_dtype),
        grid_spec=pltpu.PrefetchScalarGridSpec(
            num_scalar_prefetch=0,
            grid=(cols_pad // tile_m,),
            in_specs=[
                pl.BlockSpec((tile_m, f_in), lambda i: (i, 0)),
                pl.BlockSpec((f_in, f_out), lambda i: (0, 0)),
            ],
            out_specs=pl.BlockSpec((tile_m, f_out), lambda i: (i, 0)),
        ),
        compiler_params=pltpu.CompilerParams(
            dimension_semantics=("parallel",),
            vmem_limit_bytes=vmem_limit_bytes,
        ),
        cost_estimate=pl.CostEstimate(
            flops=2 * N * f_in * f_out,
            bytes_accessed=4 * (N * f_in + f_in * f_out)
            + jnp.dtype(support_dtype).itemsize * N * f_out,
            transcendentals=0,
        ),
    )(x_p, weight)

    # ---- kernel 2: out = adj @ support + bias (contraction-tiled) ------
    adj_itemsize = jnp.dtype(adj_p.dtype).itemsize
    out_p = pl.pallas_call(
        _aggregate_kernel,
        out_shape=jax.ShapeDtypeStruct((rows_pad, f_out), out_dtype),
        grid_spec=pltpu.PrefetchScalarGridSpec(
            num_scalar_prefetch=0,
            grid=(rows_pad // tile_n, cols_pad // tile_k),
            in_specs=[
                pl.BlockSpec((tile_n, tile_k), lambda i, k: (i, k)),   # adj tile
                pl.BlockSpec((tile_k, f_out), lambda i, k: (k, 0)),    # support tile
                pl.BlockSpec((1, f_out), lambda i, k: (0, 0)),         # bias
            ],
            out_specs=pl.BlockSpec((tile_n, f_out), lambda i, k: (i, 0)),
            scratch_shapes=[pltpu.VMEM((tile_n, f_out), jnp.float32)],
        ),
        compiler_params=pltpu.CompilerParams(
            dimension_semantics=("parallel", "arbitrary"),
            vmem_limit_bytes=vmem_limit_bytes,
        ),
        cost_estimate=pl.CostEstimate(
            flops=2 * N * N * f_out,
            bytes_accessed=adj_itemsize * (N * N + N * f_out)
            + 4 * (N * f_out + f_out),
            transcendentals=0,
        ),
    )(adj_p, support, bias2d)

    return out_p if rows_pad == N else out_p[:N]


def _reference(x, adj, weight, bias):
    return adj @ (x @ weight) + bias[None, :]


if __name__ == "__main__":
    key = jax.random.PRNGKey(0)

    # Small shapes consistent with the module's forward.
    N, F_IN, F_OUT = 128, 64, 128
    k_x, k_adj, k_w, k_b = jax.random.split(key, 4)

    x = jax.random.normal(k_x, (N, F_IN), dtype=jnp.float32)

    # Dense row-normalized adjacency with self-loops (torch.spmm semantics
    # reduce to a dense matmul here).
    a = (jax.random.uniform(k_adj, (N, N)) < 0.1).astype(jnp.float32)
    a = a + jnp.eye(N, dtype=jnp.float32)
    adj = a / jnp.sum(a, axis=1, keepdims=True)

    # reset_parameters(): uniform(-stdv, stdv) with stdv = 1/sqrt(out_features)
    stdv = 1.0 / math.sqrt(F_OUT)
    weight = jax.random.uniform(
        k_w, (F_IN, F_OUT), minval=-stdv, maxval=stdv, dtype=jnp.float32
    )
    bias = jax.random.uniform(
        k_b, (F_OUT,), minval=-stdv, maxval=stdv, dtype=jnp.float32
    )

    ref = _reference(x, adj, weight, bias)

    # 1) f32 path (exact module semantics).
    gcn_f32 = jax.jit(graph_convolution)
    out = jax.block_until_ready(gcn_f32(x, adj, weight, bias))
    assert out.shape == (N, F_OUT)
    assert jnp.allclose(out, ref, atol=1e-4, rtol=1e-4), "f32 mismatch vs reference"

    # 2) bf16 adj/support stream (halves HBM bytes on the dominant N^2 path,
    #    f32 accumulation) — looser tolerance.
    gcn_bf16 = jax.jit(
        functools.partial(graph_convolution, matmul_dtype=jnp.bfloat16)
    )
    out_bf16 = jax.block_until_ready(gcn_bf16(x, adj, weight, bias))
    assert jnp.allclose(out_bf16, ref, atol=5e-2, rtol=5e-2), "bf16 mismatch"

    # 3) Non-tile-multiple node count exercises the zero-padding path.
    N2 = 200
    x2 = jax.random.normal(k_x, (N2, F_IN), dtype=jnp.float32)
    a2 = (jax.random.uniform(k_adj, (N2, N2)) < 0.1).astype(jnp.float32)
    a2 = a2 + jnp.eye(N2, dtype=jnp.float32)
    adj2 = a2 / jnp.sum(a2, axis=1, keepdims=True)
    out2 = jax.block_until_ready(jax.jit(graph_convolution)(x2, adj2, weight, bias))
    ref2 = _reference(x2, adj2, weight, bias)
    assert out2.shape == (N2, F_OUT)
    assert jnp.allclose(out2, ref2, atol=1e-4, rtol=1e-4), "padded-N mismatch"

    print("KERNEL_OK")
</pallas_src>

<mosaic_0001>
module attributes {stable_mosaic.version = 11 : i64} {
  func.func @_feature_transform_kernel(%arg0: i32, %arg1: memref<128x64xf32, #tpu.memory_space<vmem>>, %arg2: memref<64x128xf32, #tpu.memory_space<vmem>>, %arg3: memref<128x128xf32, #tpu.memory_space<vmem>>) attributes {dimension_semantics = [#tpu.dimension_semantics<parallel>], iteration_bounds = array<i64: 1>, scalar_prefetch = 0 : i64, scratch_operands = 0 : i64, tpu.core_type = #tpu.core_type<tc>, window_params = [{transform_indices = @transform_0, window_bounds = array<i64: 128, 64>}, {pipeline_mode = #tpu.pipeline_mode<synchronous>, transform_indices = @transform_1, window_bounds = array<i64: 64, 128>}, {transform_indices = @transform_2, window_bounds = array<i64: 128, 128>}]} {
    %c0 = arith.constant 0 : index
    %c0_0 = arith.constant 0 : index
    %0 = vector.load %arg1[%c0, %c0_0] : memref<128x64xf32, #tpu.memory_space<vmem>>, vector<128x64xf32>
    %c0_1 = arith.constant 0 : index
    %c0_2 = arith.constant 0 : index
    %1 = vector.load %arg2[%c0_1, %c0_2] : memref<64x128xf32, #tpu.memory_space<vmem>>, vector<64x128xf32>
    %cst = arith.constant dense<0.000000e+00> : vector<128x128xf32>
    %2 = tpu.matmul %0, %1, %cst {dimension_numbers = #tpu.dot_dimension_numbers<[1], [0], [0], [1], [0, 0, 1, 1], [], []>} : vector<128x64xf32>, vector<64x128xf32>, vector<128x128xf32> -> vector<128x128xf32>
    %c0_3 = arith.constant 0 : index
    %c0_4 = arith.constant 0 : index
    %3 = vector.load %arg3[%c0_3, %c0_4] : memref<128x128xf32, #tpu.memory_space<vmem>>, vector<128x128xf32>
    tpu.vector_store %arg3[%c0_3, %c0_4], %2 {strides = array<i32>} : memref<128x128xf32, #tpu.memory_space<vmem>>, vector<128x128xf32>,
    return
  }
  func.func @transform_0(%arg0: i32) -> (i32, i32) {
    %c0_i32 = arith.constant 0 : i32
    %c0_i32_0 = arith.constant 0 : i32
    return %arg0, %c0_i32 : i32, i32
  }
  func.func @transform_1(%arg0: i32) -> (i32, i32) {
    %c0_i32 = arith.constant 0 : i32
    %c0_i32_0 = arith.constant 0 : i32
    %c0_i32_1 = arith.constant 0 : i32
    return %c0_i32, %c0_i32_0 : i32, i32
  }
  func.func @transform_2(%arg0: i32) -> (i32, i32) {
    %c0_i32 = arith.constant 0 : i32
    %c0_i32_0 = arith.constant 0 : i32
    return %arg0, %c0_i32 : i32, i32
  }
}

module attributes {stable_mosaic.version = 11 : i64} {
  func.func @_aggregate_kernel(%arg0: i32, %arg1: i32, %arg2: memref<128x128xf32, #tpu.memory_space<vmem>>, %arg3: memref<128x128xf32, #tpu.memory_space<vmem>>, %arg4: memref<1x128xf32, #tpu.memory_space<vmem>>, %arg5: memref<128x128xf32, #tpu.memory_space<vmem>>, %arg6: memref<128x128xf32, #tpu.memory_space<vmem>>) attributes {dimension_semantics = [#tpu.dimension_semantics<parallel>, #tpu.dimension_semantics<arbitrary>], iteration_bounds = array<i64: 1, 1>, scalar_prefetch = 0 : i64, scratch_operands = 1 : i64, tpu.core_type = #tpu.core_type<tc>, window_params = [{transform_indices = @transform_0, window_bounds = array<i64: 128, 128>}, {transform_indices = @transform_1, window_bounds = array<i64: 128, 128>}, {pipeline_mode = #tpu.pipeline_mode<synchronous>, transform_indices = @transform_2, window_bounds = array<i64: 1, 128>}, {transform_indices = @transform_3, window_bounds = array<i64: 128, 128>}]} {
    %c0_i32 = arith.constant 0 : i32
    %0 = arith.cmpi eq, %arg1, %c0_i32 : i32
    %1 = arith.extui %0 : i1 to i32
    %c0_i32_0 = arith.constant 0 : i32
    %2 = arith.cmpi ne, %1, %c0_i32_0 : i32
    scf.if %2 {
      %cst_10 = arith.constant 0.000000e+00 : f32
      %12 = vector.broadcast %cst_10 : f32 to vector<128x128xf32>
      %c0_11 = arith.constant 0 : index
      %c0_12 = arith.constant 0 : index
      %13 = vector.load %arg6[%c0_11, %c0_12] : memref<128x128xf32, #tpu.memory_space<vmem>>, vector<128x128xf32>
      tpu.vector_store %arg6[%c0_11, %c0_12], %12 {strides = array<i32>} : memref<128x128xf32, #tpu.memory_space<vmem>>, vector<128x128xf32>,
    } else {
    }
    %c0 = arith.constant 0 : index
    %c0_1 = arith.constant 0 : index
    %3 = vector.load %arg6[%c0, %c0_1] : memref<128x128xf32, #tpu.memory_space<vmem>>, vector<128x128xf32>
    %c0_2 = arith.constant 0 : index
    %c0_3 = arith.constant 0 : index
    %4 = vector.load %arg2[%c0_2, %c0_3] : memref<128x128xf32, #tpu.memory_space<vmem>>, vector<128x128xf32>
    %c0_4 = arith.constant 0 : index
    %c0_5 = arith.constant 0 : index
    %5 = vector.load %arg3[%c0_4, %c0_5] : memref<128x128xf32, #tpu.memory_space<vmem>>, vector<128x128xf32>
    %cst = arith.constant dense<0.000000e+00> : vector<128x128xf32>
    %6 = tpu.matmul %4, %5, %cst {dimension_numbers = #tpu.dot_dimension_numbers<[1], [0], [0], [1], [0, 0, 1, 1], [], []>} : vector<128x128xf32>, vector<128x128xf32>, vector<128x128xf32> -> vector<128x128xf32>
    %7 = arith.addf %3, %6 : vector<128x128xf32>
    %c0_6 = arith.constant 0 : index
    %c0_7 = arith.constant 0 : index
    %8 = vector.load %arg6[%c0_6, %c0_7] : memref<128x128xf32, #tpu.memory_space<vmem>>, vector<128x128xf32>
    tpu.vector_store %arg6[%c0_6, %c0_7], %7 {strides = array<i32>} : memref<128x128xf32, #tpu.memory_space<vmem>>, vector<128x128xf32>,
    %c0_i32_8 = arith.constant 0 : i32
    %9 = arith.cmpi eq, %arg1, %c0_i32_8 : i32
    %10 = arith.extui %9 : i1 to i32
    %c0_i32_9 = arith.constant 0 : i32
    %11 = arith.cmpi ne, %10, %c0_i32_9 : i32
    scf.if %11 {
      %c0_10 = arith.constant 0 : index
      %c0_11 = arith.constant 0 : index
      %12 = vector.load %arg6[%c0_10, %c0_11] : memref<128x128xf32, #tpu.memory_space<vmem>>, vector<128x128xf32>
      %c0_12 = arith.constant 0 : index
      %c0_13 = arith.constant 0 : index
      %13 = vector.load %arg4[%c0_12, %c0_13] : memref<1x128xf32, #tpu.memory_space<vmem>>, vector<1x128xf32>
      %14 = vector.broadcast %13 : vector<1x128xf32> to vector<128x128xf32>
      %15 = arith.addf %12, %14 : vector<128x128xf32>
      %c0_14 = arith.constant 0 : index
      %c0_15 = arith.constant 0 : index
      %16 = vector.load %arg5[%c0_14, %c0_15] : memref<128x128xf32, #tpu.memory_space<vmem>>, vector<128x128xf32>
      tpu.vector_store %arg5[%c0_14, %c0_15], %15 {strides = array<i32>} : memref<128x128xf32, #tpu.memory_space<vmem>>, vector<128x128xf32>,
    } else {
    }
    return
  }
  func.func @transform_0(%arg0: i32, %arg1: i32) -> (i32, i32) {
    %c0_i32 = arith.constant 0 : i32
    return %arg0, %arg1 : i32, i32
  }
  func.func @transform_1(%arg0: i32, %arg1: i32) -> (i32, i32) {
    %c0_i32 = arith.constant 0 : i32
    %c0_i32_0 = arith.constant 0 : i32
    return %arg1, %c0_i32 : i32, i32
  }
  func.func @transform_2(%arg0: i32, %arg1: i32) -> (i32, i32) {
    %c0_i32 = arith.constant 0 : i32
    %c0_i32_0 = arith.constant 0 : i32
    %c0_i32_1 = arith.constant 0 : i32
    return %c0_i32, %c0_i32_0 : i32, i32
  }
  func.func @transform_3(%arg0: i32, %arg1: i32) -> (i32, i32) {
    %c0_i32 = arith.constant 0 : i32
    %c0_i32_0 = arith.constant 0 : i32
    return %arg0, %c0_i32 : i32, i32
  }
}

</mosaic_0001>

<llo_original>
// kernel: graph_convolution.2
$region0: #{graph_convolution.2}
  #allocation0 [shape = 'u32[]', space=smem, size = 0x4, offset = 0x4, fixed_abs, tag = 'smem constant byte address 0x4 - core index']
  #allocation1 [shape = 'u32[144,128]{1,0:T(1,128)}', space=vmem, size = 0x12000, scoped, tag = 'internal scratch']
  %s0 = inlined_call_operand.vmem [shape: f32[128,64], index: 0, kind: input, shape index: {}]
  %s1 = inlined_call_operand.vmem [shape: f32[64,128], index: 1, kind: input, shape index: {}]
  %s2 = inlined_call_operand.vmem [shape: f32[128,128], index: 2, kind: output, shape index: {}]
  %s3 = sld [smem:[#allocation0]]
  $region18: #{graph_convolution.2} parent=0
    _
  %s5 = ssub.s32 1, %s3
  %s6 = scalar_select 0, %s5, %s3
  // Predicated region
  $region2: #{graph_convolution.2} parent=0 // pred_check
    _
  $region3: #{graph_convolution.2} parent=0 // pred_check_branch
    %8 = sbr.rel (0) target = $region5
  $region4: #{graph_convolution.2} parent=0 // pred_region
    _
  $region5: #{graph_convolution.2} parent=0 // pred_fallthru
    _
  // Predicated region
  $region6: #{graph_convolution.2} parent=0 // pred_check
    _
  $region7: #{graph_convolution.2} parent=0 // pred_check_branch
    %10 = sbr.rel (0) target = $region9
  $region8: #{graph_convolution.2} parent=0 // pred_region
    _
  $region9: #{graph_convolution.2} parent=0 // pred_fallthru
    _
  %v11 = vld [vmem:[%s0] sm:$0xff]
  %v12 = vld [vmem:[%s0 + $0x8] sm:$0xff]
  %v13 = vld [vmem:[%s0 + $0x10] sm:$0xff]
  %v14 = vld [vmem:[%s0 + $0x18] sm:$0xff]
  %v15 = vld [vmem:[%s0 + $0x20] sm:$0xff]
  %v16 = vld [vmem:[%s0 + $0x28] sm:$0xff]
  %v17 = vld [vmem:[%s0 + $0x30] sm:$0xff]
  %v18 = vld [vmem:[%s0 + $0x38] sm:$0xff]
  %v19 = vld [vmem:[%s0 + $0x40] sm:$0xff]
  %v20 = vld [vmem:[%s0 + $0x48] sm:$0xff]
  %v21 = vld [vmem:[%s0 + $0x50] sm:$0xff]
  %v22 = vld [vmem:[%s0 + $0x58] sm:$0xff]
  %v23 = vld [vmem:[%s0 + $0x60] sm:$0xff]
  %v24 = vld [vmem:[%s0 + $0x68] sm:$0xff]
  %v25 = vld [vmem:[%s0 + $0x70] sm:$0xff]
  %v26 = vld [vmem:[%s0 + $0x78] sm:$0xff]
  %v27 = vld [vmem:[%s1] sm:$0xff]
  %v28 = vld [vmem:[%s1 + $0x8] sm:$0xff]
  %v29 = vld [vmem:[%s1 + $0x10] sm:$0xff]
  %v30 = vld [vmem:[%s1 + $0x18] sm:$0xff]
  %v31 = vld [vmem:[%s1 + $0x20] sm:$0xff]
  %v32 = vld [vmem:[%s1 + $0x28] sm:$0xff]
  %v33 = vld [vmem:[%s1 + $0x30] sm:$0xff]
  %v34 = vld [vmem:[%s1 + $0x38] sm:$0xff]
  %vm35 = vcmask 523264
  %v37 = vsel %vm35, %v11, 0
  %v40 = vsel %vm35, %v12, 0
  %v43 = vsel %vm35, %v13, 0
  %v46 = vsel %vm35, %v14, 0
  %v49 = vsel %vm35, %v15, 0
  %v52 = vsel %vm35, %v16, 0
  %v55 = vsel %vm35, %v17, 0
  %v58 = vsel %vm35, %v18, 0
  %v61 = vsel %vm35, %v19, 0
  %v64 = vsel %vm35, %v20, 0
  %v67 = vsel %vm35, %v21, 0
  %v70 = vsel %vm35, %v22, 0
  %v73 = vsel %vm35, %v23, 0
  %v76 = vsel %vm35, %v24, 0
  %v79 = vsel %vm35, %v25, 0
  %v82 = vsel %vm35, %v26, 0
  %84 = vmatprep.subr.mxu0 0.0
  %85 = vmatpush1.msra.mxu0 0.0
  %86 = vmatprep.subr.mxu0 0.0
  %87 = vmatpush1.msra.mxu0 0.0
  %88 = vmatprep.subr.mxu0 0.0
  %89 = vmatpush1.msra.mxu0 0.0
  %90 = vmatprep.subr.mxu0 0.0
  %91 = vmatpush1.msra.mxu0 0.0
  %92 = vmatprep.subr.mxu0 0.0
  %93 = vmatpush1.msra.mxu0 0.0
  %94 = vmatprep.subr.mxu0 0.0
  %95 = vmatpush1.msra.mxu0 0.0
  %96 = vmatprep.subr.mxu0 0.0
  %97 = vmatpush1.msra.mxu0 0.0
  %98 = vmatprep.subr.mxu0 0.0
  %99 = vmatpush1.msra.mxu0 0.0
  %100 = vmatprep.subr.mxu0 0.0
  %101 = vmatpush1.msra.mxu0 %v34
  %102 = vmatprep.subr.mxu0 0.0
  %103 = vmatpush1.msra.mxu0 %v33
  %104 = vmatprep.subr.mxu0 0.0
  %105 = vmatpush1.msra.mxu0 %v32
  %106 = vmatprep.subr.mxu0 0.0
  %107 = vmatpush1.msra.mxu0 %v31
  %108 = vmatprep.subr.mxu0 0.0
  %109 = vmatpush1.msra.mxu0 %v30
  %110 = vmatprep.subr.mxu0 0.0
  %111 = vmatpush1.msra.mxu0 %v29
  %112 = vmatprep.subr.mxu0 0.0
  %113 = vmatpush1.msra.mxu0 %v28
  %114 = vmatprep.subr.mxu0 0.0
  %115 = vmatpush1.msra.mxu0 %v27
  %116 = vmatprep.subr.mxu0 0.0
  %117 = vmatpush2.msra.mxu0 0.0
  %118 = vmatprep.subr.mxu0 0.0
  %119 = vmatpush2.msra.mxu0 0.0
  %120 = vmatprep.subr.mxu0 0.0
  %121 = vmatpush2.msra.mxu0 0.0
  %122 = vmatprep.subr.mxu0 0.0
  %123 = vmatpush2.msra.mxu0 0.0
  %124 = vmatprep.subr.mxu0 0.0
  %125 = vmatpush2.msra.mxu0 0.0
  %126 = vmatprep.subr.mxu0 0.0
  %127 = vmatpush2.msra.mxu0 0.0
  %128 = vmatprep.subr.mxu0 0.0
  %129 = vmatpush2.msra.mxu0 0.0
  %130 = vmatprep.subr.mxu0 0.0
  %131 = vmatpush2.msra.mxu0 0.0
  %132 = vmatprep.subr.mxu0 0.0
  %133 = vmatpush2.msra.mxu0 0.0
  %134 = vmatprep.subr.mxu0 0.0
  %135 = vmatpush2.msra.mxu0 0.0
  %136 = vmatprep.subr.mxu0 0.0
  %137 = vmatpush2.msra.mxu0 0.0
  %138 = vmatprep.subr.mxu0 0.0
  %139 = vmatpush2.msra.mxu0 0.0
  %140 = vmatprep.subr.mxu0 0.0
  %141 = vmatpush2.msra.mxu0 0.0
  %142 = vmatprep.subr.mxu0 0.0
  %143 = vmatpush2.msra.mxu0 0.0
  %144 = vmatprep.subr.mxu0 0.0
  %145 = vmatpush2.msra.mxu0 0.0
  %146 = vmatprep.subr.mxu0 0.0
  %147 = vmatpush2.msra.mxu0 0.0
  %148 = vmatprep.mubr.f32.mxu0 0.0
  %149 = vmatmul.mubr.f32.gmra.mxu0 %v37
  %v150 = vpop.f32.mrf.mxu0
  %v151 = vadd.f32 0.0, %v150
  %v152 = vpop.f32.mrf.mxu0
  %153 = vmatprep.mubr.f32.mxu0 0.0
  %154 = vmatmul.mubr.f32.gmra.mxu0 %v40
  %v155 = vpop.f32.mrf.mxu0
  %v156 = vadd.f32 0.0, %v155
  %v157 = vpop.f32.mrf.mxu0
  %158 = vmatprep.mubr.f32.mxu0 0.0
  %159 = vmatmul.mubr.f32.gmra.mxu0 %v43
  %v160 = vpop.f32.mrf.mxu0
  %v161 = vadd.f32 0.0, %v160
  %v162 = vpop.f32.mrf.mxu0
  %163 = vmatprep.mubr.f32.mxu0 0.0
  %164 = vmatmul.mubr.f32.gmra.mxu0 %v46
  %v165 = vpop.f32.mrf.mxu0
  %v166 = vadd.f32 0.0, %v165
  %v167 = vpop.f32.mrf.mxu0
  %168 = vmatprep.mubr.f32.mxu0 0.0
  %169 = vmatmul.mubr.f32.gmra.mxu0 %v49
  %v170 = vpop.f32.mrf.mxu0
  %v171 = vadd.f32 0.0, %v170
  %v172 = vpop.f32.mrf.mxu0
  %173 = vmatprep.mubr.f32.mxu0 0.0
  %174 = vmatmul.mubr.f32.gmra.mxu0 %v52
  %v175 = vpop.f32.mrf.mxu0
  %v176 = vadd.f32 0.0, %v175
  %v177 = vpop.f32.mrf.mxu0
  %178 = vmatprep.mubr.f32.mxu0 0.0
  %179 = vmatmul.mubr.f32.gmra.mxu0 %v55
  %v180 = vpop.f32.mrf.mxu0
  %v181 = vadd.f32 0.0, %v180
  %v182 = vpop.f32.mrf.mxu0
  %183 = vmatprep.mubr.f32.mxu0 0.0
  %184 = vmatmul.mubr.f32.gmra.mxu0 %v58
  %v185 = vpop.f32.mrf.mxu0
  %v186 = vadd.f32 0.0, %v185
  %v187 = vpop.f32.mrf.mxu0
  %188 = vmatprep.mubr.f32.mxu0 0.0
  %189 = vmatmul.mubr.f32.gmra.mxu0 %v61
  %v190 = vpop.f32.mrf.mxu0
  %v191 = vadd.f32 0.0, %v190
  %v192 = vpop.f32.mrf.mxu0
  %193 = vmatprep.mubr.f32.mxu0 0.0
  %194 = vmatmul.mubr.f32.gmra.mxu0 %v64
  %v195 = vpop.f32.mrf.mxu0
  %v196 = vadd.f32 0.0, %v195
  %v197 = vpop.f32.mrf.mxu0
  %198 = vmatprep.mubr.f32.mxu0 0.0
  %199 = vmatmul.mubr.f32.gmra.mxu0 %v67
  %v200 = vpop.f32.mrf.mxu0
  %v201 = vadd.f32 0.0, %v200
  %v202 = vpop.f32.mrf.mxu0
  %203 = vmatprep.mubr.f32.mxu0 0.0
  %204 = vmatmul.mubr.f32.gmra.mxu0 %v70
  %v205 = vpop.f32.mrf.mxu0
  %v206 = vadd.f32 0.0, %v205
  %v207 = vpop.f32.mrf.mxu0
  %208 = vmatprep.mubr.f32.mxu0 0.0
  %209 = vmatmul.mubr.f32.gmra.mxu0 %v73
  %v210 = vpop.f32.mrf.mxu0
  %v211 = vadd.f32 0.0, %v210
  %v212 = vpop.f32.mrf.mxu0
  %213 = vmatprep.mubr.f32.mxu0 0.0
  %214 = vmatmul.mubr.f32.gmra.mxu0 %v76
  %v215 = vpop.f32.mrf.mxu0
  %v216 = vadd.f32 0.0, %v215
  %v217 = vpop.f32.mrf.mxu0
  %218 = vmatprep.mubr.f32.mxu0 0.0
  %219 = vmatmul.mubr.f32.gmra.mxu0 %v79
  %v220 = vpop.f32.mrf.mxu0
  %v221 = vadd.f32 0.0, %v220
  %v222 = vpop.f32.mrf.mxu0
  %223 = vmatprep.mubr.f32.mxu0 0.0
  %224 = vmatmul.mubr.f32.gmra.mxu0 %v82
  %v225 = vpop.f32.mrf.mxu0
  %v226 = vadd.f32 0.0, %v225
  %v227 = vpop.f32.mrf.mxu0
  %228 = vdwg.mxu0
  %229 = vst [vmem:[%s2] sm:$0xff] %v151
  %230 = vst [vmem:[%s2 + $0x8] sm:$0xff] %v156
  %231 = vst [vmem:[%s2 + $0x10] sm:$0xff] %v161
  %232 = vst [vmem:[%s2 + $0x18] sm:$0xff] %v166
  %233 = vst [vmem:[%s2 + $0x20] sm:$0xff] %v171
  %234 = vst [vmem:[%s2 + $0x28] sm:$0xff] %v176
  %235 = vst [vmem:[%s2 + $0x30] sm:$0xff] %v181
  %236 = vst [vmem:[%s2 + $0x38] sm:$0xff] %v186
  %237 = vst [vmem:[%s2 + $0x40] sm:$0xff] %v191
  %238 = vst [vmem:[%s2 + $0x48] sm:$0xff] %v196
  %239 = vst [vmem:[%s2 + $0x50] sm:$0xff] %v201
  %240 = vst [vmem:[%s2 + $0x58] sm:$0xff] %v206
  %241 = vst [vmem:[%s2 + $0x60] sm:$0xff] %v211
  %242 = vst [vmem:[%s2 + $0x68] sm:$0xff] %v216
  %243 = vst [vmem:[%s2 + $0x70] sm:$0xff] %v221
  %244 = vst [vmem:[%s2 + $0x78] sm:$0xff] %v226
  // Predicated region
  $region10: #{graph_convolution.2} parent=0 // pred_check
    _
  $region11: #{graph_convolution.2} parent=0 // pred_check_branch
    %246 = sbr.rel (0) target = $region13
  $region12: #{graph_convolution.2} parent=0 // pred_region
    _
  $region13: #{graph_convolution.2} parent=0 // pred_fallthru
    _
  // Predicated region
  $region14: #{graph_convolution.2} parent=0 // pred_check
    _
  $region15: #{graph_convolution.2} parent=0 // pred_check_branch
    %248 = sbr.rel (0) target = $region17
  $region16: #{graph_convolution.2} parent=0 // pred_region
    _
  $region17: #{graph_convolution.2} parent=0 // pred_fallthru
    _

// kernel: graph_convolution.3
$region0: #{graph_convolution.3}
  #allocation0 [shape = 'u32[]', space=smem, size = 0x4, offset = 0x4, fixed_abs, tag = 'smem constant byte address 0x4 - core index']
  #allocation1 [shape = 'u32[144,128]{1,0:T(1,128)}', space=vmem, size = 0x12000, scoped, tag = 'internal scratch']
  #allocation2 [shape = 'f32[128,128]{1,0:T(8,128)}', space=vmem, size = 0x10000, scoped, tag = 'scratch operand']
  %s0 = inlined_call_operand.vmem [shape: f32[128,128], index: 0, kind: input, shape index: {}]
  %s1 = inlined_call_operand.vmem [shape: f32[128,128], index: 1, kind: input, shape index: {}]
  %s2 = inlined_call_operand.vmem [shape: f32[1,128], index: 2, kind: input, shape index: {}]
  %s3 = inlined_call_operand.hbm [shape: f32[128,128], index: 3, kind: output, shape index: {}]
  %s4 = sld [smem:[#allocation0]]
  $region30: #{graph_convolution.3} parent=0
    _
  %s6 = ssub.s32 1, %s4
  %s7 = scalar_select 0, %s6, %s4
  $region1: #{graph_convolution.3} parent=0
    #allocation3 [shape = 'u8[65536]{0}', space=vmem, size = 0x10000, scoped, tag = 'output window, operand 0, single buffered']
    #allocation4 [shape = 's32[1]{0}', space=sflag, size = 0x4, scoped, tag = 'scoped memory for graph_convolution.3']
    %8 = vsyncpa [#allocation4], 0
    // Predicated region
    $region2: #{graph_convolution.3} parent=1 // pred_check
      _
    $region3: #{graph_convolution.3} parent=1 // pred_check_branch
      %10 = sbr.rel (0) target = $region5
    $region4: #{graph_convolution.3} parent=1 // pred_region
      _
    $region5: #{graph_convolution.3} parent=1 // pred_fallthru
      _
    // Predicated region
    $region6: #{graph_convolution.3} parent=1 // pred_check
      _
    $region7: #{graph_convolution.3} parent=1 // pred_check_branch
      %12 = sbr.rel (0) target = $region9
    $region8: #{graph_convolution.3} parent=1 // pred_region
      _
    $region9: #{graph_convolution.3} parent=1 // pred_fallthru
      _
    // Predicated region
    $region10: #{graph_convolution.3} parent=1 // pred_check
      _
    $region11: #{graph_convolution.3} parent=1 // pred_check_branch
      %14 = sbr.rel (0) target = $region13
    $region12: #{graph_convolution.3} parent=1 // pred_region
      _
    $region13: #{graph_convolution.3} parent=1 // pred_fallthru
      _
    %p15 = scmp.eq.s32.totalorder 0, 0
    // Predicated region
    $region14: #{graph_convolution.3} parent=1 // pred_check
      %p16 = pneg %p15
    $region15: #{graph_convolution.3} parent=1 // pred_check_branch
      %18 = sbr.rel (%p16) target = $region17
    $region16: #{graph_convolution.3} parent=1 // pred_region
      %19 = vst [vmem:[#allocation2] sm:$0xff] 0.0
      %20 = vst [vmem:[#allocation2 + $0x8] sm:$0xff] 0.0
      %21 = vst [vmem:[#allocation2 + $0x10] sm:$0xff] 0.0
      %22 = vst [vmem:[#allocation2 + $0x18] sm:$0xff] 0.0
      %23 = vst [vmem:[#allocation2 + $0x20] sm:$0xff] 0.0
      %24 = vst [vmem:[#allocation2 + $0x28] sm:$0xff] 0.0
      %25 = vst [vmem:[#allocation2 + $0x30] sm:$0xff] 0.0
      %26 = vst [vmem:[#allocation2 + $0x38] sm:$0xff] 0.0
      %27 = vst [vmem:[#allocation2 + $0x40] sm:$0xff] 0.0
      %28 = vst [vmem:[#allocation2 + $0x48] sm:$0xff] 0.0
      %29 = vst [vmem:[#allocation2 + $0x50] sm:$0xff] 0.0
      %30 = vst [vmem:[#allocation2 + $0x58] sm:$0xff] 0.0
      %31 = vst [vmem:[#allocation2 + $0x60] sm:$0xff] 0.0
      %32 = vst [vmem:[#allocation2 + $0x68] sm:$0xff] 0.0
      %33 = vst [vmem:[#allocation2 + $0x70] sm:$0xff] 0.0
      %34 = vst [vmem:[#allocation2 + $0x78] sm:$0xff] 0.0
    $region17: #{graph_convolution.3} parent=1 // pred_fallthru
      _
    %v35 = vld [vmem:[#allocation2] sm:$0xff]
    %v36 = vld [vmem:[#allocation2 + $0x8] sm:$0xff]
    %v37 = vld [vmem:[#allocation2 + $0x10] sm:$0xff]
    %v38 = vld [vmem:[#allocation2 + $0x18] sm:$0xff]
    %v39 = vld [vmem:[#allocation2 + $0x20] sm:$0xff]
    %v40 = vld [vmem:[#allocation2 + $0x28] sm:$0xff]
    %v41 = vld [vmem:[#allocation2 + $0x30] sm:$0xff]
    %v42 = vld [vmem:[#allocation2 + $0x38] sm:$0xff]
    %v43 = vld [vmem:[#allocation2 + $0x40] sm:$0xff]
    %v44 = vld [vmem:[#allocation2 + $0x48] sm:$0xff]
    %v45 = vld [vmem:[#allocation2 + $0x50] sm:$0xff]
    %v46 = vld [vmem:[#allocation2 + $0x58] sm:$0xff]
    %v47 = vld [vmem:[#allocation2 + $0x60] sm:$0xff]
    %v48 = vld [vmem:[#allocation2 + $0x68] sm:$0xff]
    %v49 = vld [vmem:[#allocation2 + $0x70] sm:$0xff]
    %v50 = vld [vmem:[#allocation2 + $0x78] sm:$0xff]
    %v51 = vld [vmem:[%s0] sm:$0xff]
    %v52 = vld [vmem:[%s0 + $0x8] sm:$0xff]
    %v53 = vld [vmem:[%s0 + $0x10] sm:$0xff]
    %v54 = vld [vmem:[%s0 + $0x18] sm:$0xff]
    %v55 = vld [vmem:[%s0 + $0x20] sm:$0xff]
    %v56 = vld [vmem:[%s0 + $0x28] sm:$0xff]
    %v57 = vld [vmem:[%s0 + $0x30] sm:$0xff]
    %v58 = vld [vmem:[%s0 + $0x38] sm:$0xff]
    %v59 = vld [vmem:[%s0 + $0x40] sm:$0xff]
    %v60 = vld [vmem:[%s0 + $0x48] sm:$0xff]
    %v61 = vld [vmem:[%s0 + $0x50] sm:$0xff]
    %v62 = vld [vmem:[%s0 + $0x58] sm:$0xff]
    %v63 = vld [vmem:[%s0 + $0x60] sm:$0xff]
    %v64 = vld [vmem:[%s0 + $0x68] sm:$0xff]
    %v65 = vld [vmem:[%s0 + $0x70] sm:$0xff]
    %v66 = vld [vmem:[%s0 + $0x78] sm:$0xff]
    %v67 = vld [vmem:[%s1] sm:$0xff]
    %v68 = vld [vmem:[%s1 + $0x8] sm:$0xff]
    %v69 = vld [vmem:[%s1 + $0x10] sm:$0xff]
    %v70 = vld [vmem:[%s1 + $0x18] sm:$0xff]
    %v71 = vld [vmem:[%s1 + $0x20] sm:$0xff]
    %v72 = vld [vmem:[%s1 + $0x28] sm:$0xff]
    %v73 = vld [vmem:[%s1 + $0x30] sm:$0xff]
    %v74 = vld [vmem:[%s1 + $0x38] sm:$0xff]
    %v75 = vld [vmem:[%s1 + $0x40] sm:$0xff]
    %v76 = vld [vmem:[%s1 + $0x48] sm:$0xff]
    %v77 = vld [vmem:[%s1 + $0x50] sm:$0xff]
    %v78 = vld [vmem:[%s1 + $0x58] sm:$0xff]
    %v79 = vld [vmem:[%s1 + $0x60] sm:$0xff]
    %v80 = vld [vmem:[%s1 + $0x68] sm:$0xff]
    %v81 = vld [vmem:[%s1 + $0x70] sm:$0xff]
    %v82 = vld [vmem:[%s1 + $0x78] sm:$0xff]
    %83 = vmatprep.subr.mxu0 0.0
    %84 = vmatpush1.msra.mxu0 %v82
    %85 = vmatprep.subr.mxu0 0.0
    %86 = vmatpush1.msra.mxu0 %v81
    %87 = vmatprep.subr.mxu0 0.0
    %88 = vmatpush1.msra.mxu0 %v80
    %89 = vmatprep.subr.mxu0 0.0
    %90 = vmatpush1.msra.mxu0 %v79
    %91 = vmatprep.subr.mxu0 0.0
    %92 = vmatpush1.msra.mxu0 %v78
    %93 = vmatprep.subr.mxu0 0.0
    %94 = vmatpush1.msra.mxu0 %v77
    %95 = vmatprep.subr.mxu0 0.0
    %96 = vmatpush1.msra.mxu0 %v76
    %97 = vmatprep.subr.mxu0 0.0
    %98 = vmatpush1.msra.mxu0 %v75
    %99 = vmatprep.subr.mxu0 0.0
    %100 = vmatpush1.msra.mxu0 %v74
    %101 = vmatprep.subr.mxu0 0.0
    %102 = vmatpush1.msra.mxu0 %v73
    %103 = vmatprep.subr.mxu0 0.0
    %104 = vmatpush1.msra.mxu0 %v72
    %105 = vmatprep.subr.mxu0 0.0
    %106 = vmatpush1.msra.mxu0 %v71
    %107 = vmatprep.subr.mxu0 0.0
    %108 = vmatpush1.msra.mxu0 %v70
    %109 = vmatprep.subr.mxu0 0.0
    %110 = vmatpush1.msra.mxu0 %v69
    %111 = vmatprep.subr.mxu0 0.0
    %112 = vmatpush1.msra.mxu0 %v68
    %113 = vmatprep.subr.mxu0 0.0
    %114 = vmatpush1.msra.mxu0 %v67
    %115 = vmatprep.subr.mxu0 0.0
    %116 = vmatpush2.msra.mxu0 0.0
    %117 = vmatprep.subr.mxu0 0.0
    %118 = vmatpush2.msra.mxu0 0.0
    %119 = vmatprep.subr.mxu0 0.0
    %120 = vmatpush2.msra.mxu0 0.0
    %121 = vmatprep.subr.mxu0 0.0
    %122 = vmatpush2.msra.mxu0 0.0
    %123 = vmatprep.subr.mxu0 0.0
    %124 = vmatpush2.msra.mxu0 0.0
    %125 = vmatprep.subr.mxu0 0.0
    %126 = vmatpush2.msra.mxu0 0.0
    %127 = vmatprep.subr.mxu0 0.0
    %128 = vmatpush2.msra.mxu0 0.0
    %129 = vmatprep.subr.mxu0 0.0
    %130 = vmatpush2.msra.mxu0 0.0
    %131 = vmatprep.subr.mxu0 0.0
    %132 = vmatpush2.msra.mxu0 0.0
    %133 = vmatprep.subr.mxu0 0.0
    %134 = vmatpush2.msra.mxu0 0.0
    %135 = vmatprep.subr.mxu0 0.0
    %136 = vmatpush2.msra.mxu0 0.0
    %137 = vmatprep.subr.mxu0 0.0
    %138 = vmatpush2.msra.mxu0 0.0
    %139 = vmatprep.subr.mxu0 0.0
    %140 = vmatpush2.msra.mxu0 0.0
    %141 = vmatprep.subr.mxu0 0.0
    %142 = vmatpush2.msra.mxu0 0.0
    %143 = vmatprep.subr.mxu0 0.0
    %144 = vmatpush2.msra.mxu0 0.0
    %145 = vmatprep.subr.mxu0 0.0
    %146 = vmatpush2.msra.mxu0 0.0
    %147 = vmatprep.mubr.f32.mxu0 0.0
    %148 = vmatmul.mubr.f32.gmra.mxu0 %v51
    %v149 = vpop.f32.mrf.mxu0
    %v150 = vadd.f32 0.0, %v149
    %v151 = vpop.f32.mrf.mxu0
    %152 = vmatprep.mubr.f32.mxu0 0.0
    %153 = vmatmul.mubr.f32.gmra.mxu0 %v52
    %v154 = vpop.f32.mrf.mxu0
    %v155 = vadd.f32 0.0, %v154
    %v156 = vpop.f32.mrf.mxu0
    %157 = vmatprep.mubr.f32.mxu0 0.0
    %158 = vmatmul.mubr.f32.gmra.mxu0 %v53
    %v159 = vpop.f32.mrf.mxu0
    %v160 = vadd.f32 0.0, %v159
    %v161 = vpop.f32.mrf.mxu0
    %162 = vmatprep.mubr.f32.mxu0 0.0
    %163 = vmatmul.mubr.f32.gmra.mxu0 %v54
    %v164 = vpop.f32.mrf.mxu0
    %v165 = vadd.f32 0.0, %v164
    %v166 = vpop.f32.mrf.mxu0
    %167 = vmatprep.mubr.f32.mxu0 0.0
    %168 = vmatmul.mubr.f32.gmra.mxu0 %v55
    %v169 = vpop.f32.mrf.mxu0
    %v170 = vadd.f32 0.0, %v169
    %v171 = vpop.f32.mrf.mxu0
    %172 = vmatprep.mubr.f32.mxu0 0.0
    %173 = vmatmul.mubr.f32.gmra.mxu0 %v56
    %v174 = vpop.f32.mrf.mxu0
    %v175 = vadd.f32 0.0, %v174
    %v176 = vpop.f32.mrf.mxu0
    %177 = vmatprep.mubr.f32.mxu0 0.0
    %178 = vmatmul.mubr.f32.gmra.mxu0 %v57
    %v179 = vpop.f32.mrf.mxu0
    %v180 = vadd.f32 0.0, %v179
    %v181 = vpop.f32.mrf.mxu0
    %182 = vmatprep.mubr.f32.mxu0 0.0
    %183 = vmatmul.mubr.f32.gmra.mxu0 %v58
    %v184 = vpop.f32.mrf.mxu0
    %v185 = vadd.f32 0.0, %v184
    %v186 = vpop.f32.mrf.mxu0
    %187 = vmatprep.mubr.f32.mxu0 0.0
    %188 = vmatmul.mubr.f32.gmra.mxu0 %v59
    %v189 = vpop.f32.mrf.mxu0
    %v190 = vadd.f32 0.0, %v189
    %v191 = vpop.f32.mrf.mxu0
    %192 = vmatprep.mubr.f32.mxu0 0.0
    %193 = vmatmul.mubr.f32.gmra.mxu0 %v60
    %v194 = vpop.f32.mrf.mxu0
    %v195 = vadd.f32 0.0, %v194
    %v196 = vpop.f32.mrf.mxu0
    %197 = vmatprep.mubr.f32.mxu0 0.0
    %198 = vmatmul.mubr.f32.gmra.mxu0 %v61
    %v199 = vpop.f32.mrf.mxu0
    %v200 = vadd.f32 0.0, %v199
    %v201 = vpop.f32.mrf.mxu0
    %202 = vmatprep.mubr.f32.mxu0 0.0
    %203 = vmatmul.mubr.f32.gmra.mxu0 %v62
    %v204 = vpop.f32.mrf.mxu0
    %v205 = vadd.f32 0.0, %v204
    %v206 = vpop.f32.mrf.mxu0
    %207 = vmatprep.mubr.f32.mxu0 0.0
    %208 = vmatmul.mubr.f32.gmra.mxu0 %v63
    %v209 = vpop.f32.mrf.mxu0
    %v210 = vadd.f32 0.0, %v209
    %v211 = vpop.f32.mrf.mxu0
    %212 = vmatprep.mubr.f32.mxu0 0.0
    %213 = vmatmul.mubr.f32.gmra.mxu0 %v64
    %v214 = vpop.f32.mrf.mxu0
    %v215 = vadd.f32 0.0, %v214
    %v216 = vpop.f32.mrf.mxu0
    %217 = vmatprep.mubr.f32.mxu0 0.0
    %218 = vmatmul.mubr.f32.gmra.mxu0 %v65
    %v219 = vpop.f32.mrf.mxu0
    %v220 = vadd.f32 0.0, %v219
    %v221 = vpop.f32.mrf.mxu0
    %222 = vmatprep.mubr.f32.mxu0 0.0
    %223 = vmatmul.mubr.f32.gmra.mxu0 %v66
    %v224 = vpop.f32.mrf.mxu0
    %v225 = vadd.f32 0.0, %v224
    %v226 = vpop.f32.mrf.mxu0
    %227 = vdwg.mxu0
    %v228 = vadd.f32 %v35, %v150
    %v229 = vadd.f32 %v36, %v155
    %v230 = vadd.f32 %v37, %v160
    %v231 = vadd.f32 %v38, %v165
    %v232 = vadd.f32 %v39, %v170
    %v233 = vadd.f32 %v40, %v175
    %v234 = vadd.f32 %v41, %v180
    %v235 = vadd.f32 %v42, %v185
    %v236 = vadd.f32 %v43, %v190
    %v237 = vadd.f32 %v44, %v195
    %v238 = vadd.f32 %v45, %v200
    %v239 = vadd.f32 %v46, %v205
    %v240 = vadd.f32 %v47, %v210
    %v241 = vadd.f32 %v48, %v215
    %v242 = vadd.f32 %v49, %v220
    %v243 = vadd.f32 %v50, %v225
    %244 = vst [vmem:[#allocation2] sm:$0xff] %v228
    %245 = vst [vmem:[#allocation2 + $0x8] sm:$0xff] %v229
    %246 = vst [vmem:[#allocation2 + $0x10] sm:$0xff] %v230
    %247 = vst [vmem:[#allocation2 + $0x18] sm:$0xff] %v231
    %248 = vst [vmem:[#allocation2 + $0x20] sm:$0xff] %v232
    %249 = vst [vmem:[#allocation2 + $0x28] sm:$0xff] %v233
    %250 = vst [vmem:[#allocation2 + $0x30] sm:$0xff] %v234
    %251 = vst [vmem:[#allocation2 + $0x38] sm:$0xff] %v235
    %252 = vst [vmem:[#allocation2 + $0x40] sm:$0xff] %v236
    %253 = vst [vmem:[#allocation2 + $0x48] sm:$0xff] %v237
    %254 = vst [vmem:[#allocation2 + $0x50] sm:$0xff] %v238
    %255 = vst [vmem:[#allocation2 + $0x58] sm:$0xff] %v239
    %256 = vst [vmem:[#allocation2 + $0x60] sm:$0xff] %v240
    %257 = vst [vmem:[#allocation2 + $0x68] sm:$0xff] %v241
    %258 = vst [vmem:[#allocation2 + $0x70] sm:$0xff] %v242
    %259 = vst [vmem:[#allocation2 + $0x78] sm:$0xff] %v243
    // Predicated region
    $region18: #{graph_convolution.3} parent=1 // pred_check
      %p260 = pneg %p15
    $region19: #{graph_convolution.3} parent=1 // pred_check_branch
      %262 = sbr.rel (%p260) target = $region21
    $region20: #{graph_convolution.3} parent=1 // pred_region
      %v263 = vld [vmem:[#allocation2] sm:$0xff]
      %v264 = vld [vmem:[#allocation2 + $0x8] sm:$0xff]
      %v265 = vld [vmem:[#allocation2 + $0x10] sm:$0xff]
      %v266 = vld [vmem:[#allocation2 + $0x18] sm:$0xff]
      %v267 = vld [vmem:[#allocation2 + $0x20] sm:$0xff]
      %v268 = vld [vmem:[#allocation2 + $0x28] sm:$0xff]
      %v269 = vld [vmem:[#allocation2 + $0x30] sm:$0xff]
      %v270 = vld [vmem:[#allocation2 + $0x38] sm:$0xff]
      %v271 = vld [vmem:[#allocation2 + $0x40] sm:$0xff]
      %v272 = vld [vmem:[#allocation2 + $0x48] sm:$0xff]
      %v273 = vld [vmem:[#allocation2 + $0x50] sm:$0xff]
      %v274 = vld [vmem:[#allocation2 + $0x58] sm:$0xff]
      %v275 = vld [vmem:[#allocation2 + $0x60] sm:$0xff]
      %v276 = vld [vmem:[#allocation2 + $0x68] sm:$0xff]
      %v277 = vld [vmem:[#allocation2 + $0x70] sm:$0xff]
      %v278 = vld [vmem:[#allocation2 + $0x78] sm:$0xff]
      %v279 = vld [vmem:[%s2] sm:$0x1]
      %v281 = vlaneseq
      %v282 = vshrl.u32 %v281, 7
      %v283 = vsub.s32 0, %v282
      %v284 = vrot.slane %v279, %v283
      %v286 = vadd.f32 %v263, %v284
      %v287 = vadd.f32 %v264, %v284
      %v288 = vadd.f32 %v265, %v284
      %v289 = vadd.f32 %v266, %v284
      %v290 = vadd.f32 %v267, %v284
      %v291 = vadd.f32 %v268, %v284
      %v292 = vadd.f32 %v269, %v284
      %v293 = vadd.f32 %v270, %v284
      %v294 = vadd.f32 %v271, %v284
      %v295 = vadd.f32 %v272, %v284
      %v296 = vadd.f32 %v273, %v284
      %v297 = vadd.f32 %v274, %v284
      %v298 = vadd.f32 %v275, %v284
      %v299 = vadd.f32 %v276, %v284
      %v300 = vadd.f32 %v277, %v284
      %v301 = vadd.f32 %v278, %v284
      %302 = vst [vmem:[#allocation3] sm:$0xff] %v286
      %303 = vst [vmem:[#allocation3 + $0x8] sm:$0xff] %v287
      %304 = vst [vmem:[#allocation3 + $0x10] sm:$0xff] %v288
      %305 = vst [vmem:[#allocation3 + $0x18] sm:$0xff] %v289
      %306 = vst [vmem:[#allocation3 + $0x20] sm:$0xff] %v290
      %307 = vst [vmem:[#allocation3 + $0x28] sm:$0xff] %v291
      %308 = vst [vmem:[#allocation3 + $0x30] sm:$0xff] %v292
      %309 = vst [vmem:[#allocation3 + $0x38] sm:$0xff] %v293
      %310 = vst [vmem:[#allocation3 + $0x40] sm:$0xff] %v294
      %311 = vst [vmem:[#allocation3 + $0x48] sm:$0xff] %v295
      %312 = vst [vmem:[#allocation3 + $0x50] sm:$0xff] %v296
      %313 = vst [vmem:[#allocation3 + $0x58] sm:$0xff] %v297
      %314 = vst [vmem:[#allocation3 + $0x60] sm:$0xff] %v298
      %315 = vst [vmem:[#allocation3 + $0x68] sm:$0xff] %v299
      %316 = vst [vmem:[#allocation3 + $0x70] sm:$0xff] %v300
      %317 = vst [vmem:[#allocation3 + $0x78] sm:$0xff] %v301
    $region21: #{graph_convolution.3} parent=1 // pred_fallthru
      _
    // Predicated region
    $region22: #{graph_convolution.3} parent=1 // pred_check
      _
    $region23: #{graph_convolution.3} parent=1 // pred_check_branch
      %319 = sbr.rel (0) target = $region25
    $region24: #{graph_convolution.3} parent=1 // pred_region
      %s321 = ssub.s32 2048, 2048
      %322 = vsyncadd [#allocation4], %s321
      %s323 = sshll.u32 [#allocation3], 4
      %s324 = int_to_ptr.vmem [resolvable:$true] %s323
      %329 = dma.vmem_to_hbm [thread:$0]  %s324, 2048, %s3, [#allocation4], 128, 128, 8
    $region25: #{graph_convolution.3} parent=1 // pred_fallthru
      _
    // Predicated region
    $region26: #{graph_convolution.3} parent=1 // pred_check
      _
    $region27: #{graph_convolution.3} parent=1 // pred_check_branch
      %331 = sbr.rel (0) target = $region29
    $region28: #{graph_convolution.3} parent=1 // pred_region
      %332 = dma.done [#allocation4], 2048
    $region29: #{graph_convolution.3} parent=1 // pred_fallthru
      _
    %333 = vsyncpa [#allocation4], 1

</llo_original>
